<compile_context>
chip_gen: v7x
topology: tpu7x:2x2x1
jax: 0.10.0
libtpu: 0.0.40
codegen_flags: <defaults>
</compile_context>

<pallas_src>
import jax
import jax.numpy as jnp
from jax.experimental import pallas as pl


def _conv_kernel(xcol_ref, w_ref, o_ref):
    """Single fused step (no grid).

    xcol_ref: (K2C+1, N*HW) bf16   im2col'd batch with a trailing row of ones
    w_ref:    (Cout, K2C+1) bf16   BN-folded weights, last column = folded bias
    o_ref:    (Cout, N*HW)  f32    lane-dense output
    """
    acc = jnp.dot(w_ref[...], xcol_ref[...],
                  preferred_element_type=jnp.float32)      # (Cout, N*HW) f32
    o_ref[...] = jnp.maximum(acc, 0.0).astype(o_ref.dtype)  # ReLU


def conv_wrapper_forward(x_nchw, w_oihw, b, bn_gamma, bn_beta, bn_mean, bn_var,
                         eps=1e-5, double_out=False):
    """Pallas implementation of ConvWrapper.forward (kernel=3, stride=1).

    x_nchw: (N, Cin, H, W) float32
    w_oihw: (Cout, Cin, KH, KW)  (PyTorch conv weight layout)
    """
    N, Cin, H, W = x_nchw.shape
    Cout, _, KH, KW = w_oihw.shape
    assert KH % 2 == 1 and KW % 2 == 1, "only odd ('same'-padded) kernels"
    ph, pw = KH // 2, KW // 2
    K2C = KH * KW * Cin
    HW = H * W
    NHW = N * HW
    K2C1 = K2C + 1  # +1 for the folded-bias ones row

    # ---- glue (plain JAX): BN folding, bias folding, im2col ----------------
    scale = bn_gamma / jnp.sqrt(bn_var + eps)                     # (Cout,)
    # w2d[co, (kh*KW + kw)*Cin + cin] = w_oihw[co, cin, kh, kw] * scale[co]
    w2d = jnp.transpose(w_oihw, (0, 2, 3, 1)).reshape(Cout, K2C) * scale[:, None]
    b_fold = b * scale + bn_beta - bn_mean * scale                # (Cout,)
    w_aug = jnp.concatenate([w2d, b_fold[:, None]], axis=1)       # (Cout, K2C+1)
    w_aug = w_aug.astype(jnp.bfloat16)

    xp = jnp.pad(x_nchw, ((0, 0), (0, 0), (ph, ph), (pw, pw)))
    patches = [xp[:, :, kh:kh + H, kw:kw + W]                     # (N, Cin, H, W)
               for kh in range(KH) for kw in range(KW)]
    xcol = jnp.stack(patches, axis=1)                             # (N, 9, Cin, H, W)
    xcol = xcol.reshape(N, K2C, HW)                               # (N, 36, 256)
    xcol = jnp.transpose(xcol, (1, 0, 2)).reshape(K2C, NHW)       # (36, 512)
    ones = jnp.ones((1, NHW), dtype=xcol.dtype)
    xcol = jnp.concatenate([xcol, ones], axis=0)                  # (37, 512)
    xcol = xcol.astype(jnp.bfloat16)

    # ---- Pallas call: one fat step, no grid ---------------------------------
    cost = pl.CostEstimate(
        flops=2 * Cout * K2C1 * NHW,
        transcendentals=0,
        bytes_accessed=(xcol.size * 2 + w_aug.size * 2 + Cout * NHW * 4),
    )
    out_flat = pl.pallas_call(
        _conv_kernel,
        out_shape=jax.ShapeDtypeStruct((Cout, NHW), jnp.float32),
        in_specs=[
            pl.BlockSpec((K2C1, NHW), lambda: (0, 0)),
            pl.BlockSpec((Cout, K2C1), lambda: (0, 0)),
        ],
        out_specs=pl.BlockSpec((Cout, NHW), lambda: (0, 0)),
        cost_estimate=cost,
    )(xcol, w_aug)

    # Lanes are ordered (n, h, w): reshape + one tiny transpose back to NCHW.
    out = jnp.transpose(out_flat.reshape(Cout, N, H, W), (1, 0, 2, 3))
    if double_out:
        return (out, out)
    return out


def _reference_forward(x_nchw, w_oihw, b, bn_gamma, bn_beta, bn_mean, bn_var,
                       eps=1e-5):
    """Pure-JAX reference (lax conv + explicit BN + ReLU), all f32."""
    y = jax.lax.conv_general_dilated(
        x_nchw, w_oihw, window_strides=(1, 1), padding="SAME",
        dimension_numbers=("NCHW", "OIHW", "NCHW"))
    y = y + b.reshape(1, -1, 1, 1)
    scale = bn_gamma / jnp.sqrt(bn_var + eps)
    shift = bn_beta - bn_mean * scale
    y = y * scale.reshape(1, -1, 1, 1) + shift.reshape(1, -1, 1, 1)
    return jnp.maximum(y, 0.0)


if __name__ == "__main__":
    key = jax.random.PRNGKey(0)
    k_x, k_w, k_b, k_g, k_bt, k_m, k_v = jax.random.split(key, 7)

    N, Cin, H, W = 2, 4, 16, 16
    Cout, KH, KW = 8, 3, 3

    x = jax.random.normal(k_x, (N, Cin, H, W), dtype=jnp.float32)
    w = jax.random.normal(k_w, (Cout, Cin, KH, KW), dtype=jnp.float32) * 0.1
    b = jax.random.normal(k_b, (Cout,), dtype=jnp.float32) * 0.1
    bn_gamma = 1.0 + 0.1 * jax.random.normal(k_g, (Cout,), dtype=jnp.float32)
    bn_beta = 0.1 * jax.random.normal(k_bt, (Cout,), dtype=jnp.float32)
    bn_mean = 0.1 * jax.random.normal(k_m, (Cout,), dtype=jnp.float32)
    bn_var = jnp.abs(jax.random.normal(k_v, (Cout,), dtype=jnp.float32)) + 0.5

    out = conv_wrapper_forward(x, w, b, bn_gamma, bn_beta, bn_mean, bn_var)
    out = jax.block_until_ready(out)

    ref = _reference_forward(x, w, b, bn_gamma, bn_beta, bn_mean, bn_var)
    assert out.shape == (N, Cout, H, W)
    # bf16 operands with f32 accumulation: loosen the tolerance accordingly.
    assert jnp.allclose(out, ref, atol=2e-2, rtol=2e-2)

    print("KERNEL_OK")
</pallas_src>

<mosaic_0001>
module attributes {stable_mosaic.version = 11 : i64} {
  func.func @_conv_kernel(%arg0: memref<37x512xbf16, #tpu.memory_space<vmem>>, %arg1: memref<8x37xbf16, #tpu.memory_space<vmem>>, %arg2: memref<8x512xf32, #tpu.memory_space<vmem>>) attributes {dimension_semantics = [], scalar_prefetch = 0 : i64, scratch_operands = 0 : i64, tpu.core_type = #tpu.core_type<tc>} {
    %c0 = arith.constant 0 : index
    %c0_0 = arith.constant 0 : index
    %0 = vector.load %arg1[%c0, %c0_0] : memref<8x37xbf16, #tpu.memory_space<vmem>>, vector<8x37xbf16>
    %c0_1 = arith.constant 0 : index
    %c0_2 = arith.constant 0 : index
    %1 = vector.load %arg0[%c0_1, %c0_2] : memref<37x512xbf16, #tpu.memory_space<vmem>>, vector<37x512xbf16>
    %cst = arith.constant dense<0.000000e+00> : vector<8x512xf32>
    %2 = tpu.matmul %0, %1, %cst {dimension_numbers = #tpu.dot_dimension_numbers<[1], [0], [0], [1], [0, 0, 1, 1], [], []>} : vector<8x37xbf16>, vector<37x512xbf16>, vector<8x512xf32> -> vector<8x512xf32>
    %cst_3 = arith.constant 0.000000e+00 : f32
    %3 = vector.broadcast %cst_3 : f32 to vector<8x512xf32>
    %4 = arith.maximumf %2, %3 : vector<8x512xf32>
    %c0_4 = arith.constant 0 : index
    %c0_5 = arith.constant 0 : index
    %5 = vector.load %arg2[%c0_4, %c0_5] : memref<8x512xf32, #tpu.memory_space<vmem>>, vector<8x512xf32>
    tpu.vector_store %arg2[%c0_4, %c0_5], %4 {strides = array<i32>} : memref<8x512xf32, #tpu.memory_space<vmem>>, vector<8x512xf32>,
    return
  }
}

</mosaic_0001>

<llo_original>
// kernel: tpu_custom_call.1
$region0: #{tpu_custom_call.1}
  #allocation0 [shape = 'u32[]', space=smem, size = 0x4, offset = 0x4, fixed_abs, tag = 'smem constant byte address 0x4 - core index']
  #allocation1 [shape = 'u32[144,128]{1,0:T(1,128)}', space=vmem, size = 0x12000, scoped, tag = 'internal scratch']
  %s0 = inlined_call_operand.hbm [shape: bf16[37,512], index: 0, kind: input, shape index: {}]
  %s1 = inlined_call_operand.hbm [shape: bf16[8,37], index: 1, kind: input, shape index: {}]
  %s2 = inlined_call_operand.hbm [shape: f32[8,512], index: 2, kind: output, shape index: {}]
  %s3 = sld [smem:[#allocation0]]
  $region26: #{tpu_custom_call.1} parent=0
    _
  %s5 = ssub.s32 1, %s3
  %s6 = scalar_select 0, %s5, %s3
  $region1: #{tpu_custom_call.1} parent=0
    #allocation2 [shape = 'u8[40960]{0}', space=vmem, size = 0xa000, scoped, tag = 'input window, operand 0, single buffered']
    #allocation3 [shape = 's32[1]{0}', space=sflag, size = 0x4, scoped, tag = 'scoped memory for tpu_custom_call.1']
    #allocation4 [shape = 's32[1]{0}', space=sflag, size = 0x4, scoped, tag = 'scoped memory for tpu_custom_call.1']
    #allocation5 [shape = 'u8[2048]{0}', space=vmem, size = 0x800, scoped, tag = 'input window, operand 1, single buffered']
    #allocation6 [shape = 's32[1]{0}', space=sflag, size = 0x4, scoped, tag = 'scoped memory for tpu_custom_call.1']
    #allocation7 [shape = 'u8[16384]{0}', space=vmem, size = 0x4000, scoped, tag = 'output window, operand 0, single buffered']
    %7 = vsyncpa [#allocation3], 0
    %8 = vsyncpa [#allocation6], 0
    %9 = vsyncpa [#allocation4], 0
    // Predicated region
    $region2: #{tpu_custom_call.1} parent=1 // pred_check
      _
    $region3: #{tpu_custom_call.1} parent=1 // pred_check_branch
      %11 = sbr.rel (0) target = $region5
    $region4: #{tpu_custom_call.1} parent=1 // pred_region
      %s13 = ssub.s32 1280, 1280
      %14 = vsyncadd [#allocation3], %s13
      %s15 = sshll.u32 [#allocation2], 4
      %s16 = int_to_ptr.vmem [resolvable:$true] %s15
      %21 = dma.hbm_to_vmem [thread:$0]  %s0, 1280, %s16, [#allocation3], 256, 256, 16
    $region5: #{tpu_custom_call.1} parent=1 // pred_fallthru
      _
    // Predicated region
    $region6: #{tpu_custom_call.1} parent=1 // pred_check
      _
    $region7: #{tpu_custom_call.1} parent=1 // pred_check_branch
      %23 = sbr.rel (0) target = $region9
    $region8: #{tpu_custom_call.1} parent=1 // pred_region
      %s25 = ssub.s32 64, 64
      %26 = vsyncadd [#allocation6], %s25
      %s28 = sshll.u32 [#allocation5], 4
      %s29 = int_to_ptr.vmem [resolvable:$true] %s28
      %31 = dma.hbm_to_vmem [thread:$0]  %s1, 64, %s29, [#allocation6]
    $region9: #{tpu_custom_call.1} parent=1 // pred_fallthru
      _
    // Predicated region
    $region10: #{tpu_custom_call.1} parent=1 // pred_check
      _
    $region11: #{tpu_custom_call.1} parent=1 // pred_check_branch
      %33 = sbr.rel (0) target = $region13
    $region12: #{tpu_custom_call.1} parent=1 // pred_region
      %34 = dma.done [#allocation3], 1280
    $region13: #{tpu_custom_call.1} parent=1 // pred_fallthru
      _
    // Predicated region
    $region14: #{tpu_custom_call.1} parent=1 // pred_check
      _
    $region15: #{tpu_custom_call.1} parent=1 // pred_check_branch
      %36 = sbr.rel (0) target = $region17
    $region16: #{tpu_custom_call.1} parent=1 // pred_region
      %37 = dma.done [#allocation6], 64
    $region17: #{tpu_custom_call.1} parent=1 // pred_fallthru
      _
    %v39 = vld [vmem:[#allocation5] sm:$0xf]
    %v40 = vld [vmem:[#allocation2] sm:$0xff]
    %v41 = vld [vmem:[#allocation2 + $0x8] sm:$0xff]
    %v42 = vld [vmem:[#allocation2 + $0x10] sm:$0xff]
    %v43 = vld [vmem:[#allocation2 + $0x18] sm:$0xff]
    %v44 = vld [vmem:[#allocation2 + $0x20] sm:$0xff]
    %v45 = vld [vmem:[#allocation2 + $0x28] sm:$0xff]
    %v46 = vld [vmem:[#allocation2 + $0x30] sm:$0xff]
    %v47 = vld [vmem:[#allocation2 + $0x38] sm:$0xff]
    %v48 = vld [vmem:[#allocation2 + $0x40] sm:$0x77]
    %v49 = vld [vmem:[#allocation2 + $0x48] sm:$0x77]
    %v60 = vunpack.c.l.b16 %v40
    %v61 = vunpack.c.h.b16 %v40
    %v62 = vunpack.c.l.b16 %v41
    %v63 = vunpack.c.h.b16 %v41
    %v64 = vunpack.c.l.b16 %v42
    %v65 = vunpack.c.h.b16 %v42
    %v66 = vunpack.c.l.b16 %v43
    %v67 = vunpack.c.h.b16 %v43
    %v68 = vunpack.c.l.b16 %v44
    %v69 = vunpack.c.h.b16 %v44
    %v70 = vunpack.c.l.b16 %v45
    %v71 = vunpack.c.h.b16 %v45
    %v72 = vunpack.c.l.b16 %v46
    %v73 = vunpack.c.h.b16 %v46
    %v74 = vunpack.c.l.b16 %v47
    %v75 = vunpack.c.h.b16 %v47
    %v76 = vunpack.c.l.b16 %v48
    %v77 = vunpack.c.h.b16 %v48
    %v78 = vunpack.c.l.b16 %v49
    %v79 = vunpack.c.h.b16 %v49
    %v80 = vpack.c.b16 %v64, %v60
    %v81 = vpack.c.b16 %v65, %v61
    %v82 = vpack.c.b16 %v66, %v62
    %v83 = vpack.c.b16 %v67, %v63
    %v84 = vpack.c.b16 %v72, %v68
    %v85 = vpack.c.b16 %v73, %v69
    %v86 = vpack.c.b16 %v74, %v70
    %v87 = vpack.c.b16 %v75, %v71
    %v88 = vpack.c.b16 %v76, %v76
    %v89 = vpack.c.b16 %v77, %v77
    %v90 = vpack.c.b16 %v78, %v78
    %v91 = vpack.c.b16 %v79, %v79
    %vm100 = vcmask 302080
    %v102 = vsel %vm100, %v39, 0
    %vm104 = vcmask 1041408
    %vm105 = vcmask 1042432
    %v106 = vsel %vm104, 4294967295, 65535
    %v107 = vsel %vm105, %v106, 0
    %v109 = vand.u32 %v88, %v107
    %v112 = vand.u32 %v89, %v107
    %v115 = vand.u32 %v90, %v107
    %v118 = vand.u32 %v91, %v107
    %120 = vmatprep.subr.bf16.mxu0 %v81
    %121 = vmatpush1.bf16.msra.mxu0 %v80
    %122 = vmatprep.subr.bf16.mxu0 %v85
    %123 = vmatpush1.bf16.msra.mxu0 %v84
    %124 = vmatprep.subr.bf16.mxu0 %v112
    %125 = vmatpush1.bf16.msra.mxu0 %v109
    %126 = vmatprep.subr.bf16.mxu0 0
    %127 = vmatpush1.bf16.msra.mxu0 0
    %128 = vmatprep.subr.bf16.mxu0 0
    %129 = vmatpush1.bf16.msra.mxu0 0
    %130 = vmatprep.subr.bf16.mxu0 0
    %131 = vmatpush1.bf16.msra.mxu0 0
    %132 = vmatprep.subr.bf16.mxu0 0
    %133 = vmatpush1.bf16.msra.mxu0 0
    %134 = vmatprep.subr.bf16.mxu0 0
    %135 = vmatpush1.bf16.msra.mxu0 0
    %136 = vmatprep.subr.bf16.mxu0 0
    %137 = vmatpush1.bf16.msra.mxu0 0
    %138 = vmatprep.subr.bf16.mxu0 0
    %139 = vmatpush1.bf16.msra.mxu0 0
    %140 = vmatprep.subr.bf16.mxu0 0
    %141 = vmatpush1.bf16.msra.mxu0 0
    %142 = vmatprep.subr.bf16.mxu0 0
    %143 = vmatpush1.bf16.msra.mxu0 0
    %144 = vmatprep.subr.bf16.mxu0 0
    %145 = vmatpush1.bf16.msra.mxu0 0
    %146 = vmatprep.subr.bf16.mxu0 0
    %147 = vmatpush1.bf16.msra.mxu0 0
    %148 = vmatprep.subr.bf16.mxu0 0
    %149 = vmatpush1.bf16.msra.mxu0 0
    %150 = vmatprep.subr.bf16.mxu0 0
    %151 = vmatpush1.bf16.msra.mxu0 0
    %152 = vmatprep.mubr.bf16.mxu0 0
    %153 = vmatmul.mubr.bf16.gmra.mrb[0].mxu0 %v102
    %v154 = vpop.f32.mrb[0].mxu0
    %v155 = vadd.f32 0.0, %v154
    %v156 = vpop.f32.mrb[0].mxu0
    %v157 = vadd.f32 0.0, %v156
    %v158 = vpop.f32.mrb[0].mxu0
    %v159 = vpop.f32.mrb[0].mxu0
    %160 = vdwg.mxu0
    %161 = vmatprep.subr.bf16.mxu0 %v83
    %162 = vmatpush1.bf16.msra.mxu0 %v82
    %163 = vmatprep.subr.bf16.mxu0 %v87
    %164 = vmatpush1.bf16.msra.mxu0 %v86
    %165 = vmatprep.subr.bf16.mxu0 %v118
    %166 = vmatpush1.bf16.msra.mxu0 %v115
    %167 = vmatprep.subr.bf16.mxu0 0
    %168 = vmatpush1.bf16.msra.mxu0 0
    %169 = vmatprep.subr.bf16.mxu0 0
    %170 = vmatpush1.bf16.msra.mxu0 0
    %171 = vmatprep.subr.bf16.mxu0 0
    %172 = vmatpush1.bf16.msra.mxu0 0
    %173 = vmatprep.subr.bf16.mxu0 0
    %174 = vmatpush1.bf16.msra.mxu0 0
    %175 = vmatprep.subr.bf16.mxu0 0
    %176 = vmatpush1.bf16.msra.mxu0 0
    %177 = vmatprep.subr.bf16.mxu0 0
    %178 = vmatpush1.bf16.msra.mxu0 0
    %179 = vmatprep.subr.bf16.mxu0 0
    %180 = vmatpush1.bf16.msra.mxu0 0
    %181 = vmatprep.subr.bf16.mxu0 0
    %182 = vmatpush1.bf16.msra.mxu0 0
    %183 = vmatprep.subr.bf16.mxu0 0
    %184 = vmatpush1.bf16.msra.mxu0 0
    %185 = vmatprep.subr.bf16.mxu0 0
    %186 = vmatpush1.bf16.msra.mxu0 0
    %187 = vmatprep.subr.bf16.mxu0 0
    %188 = vmatpush1.bf16.msra.mxu0 0
    %189 = vmatprep.subr.bf16.mxu0 0
    %190 = vmatpush1.bf16.msra.mxu0 0
    %191 = vmatprep.subr.bf16.mxu0 0
    %192 = vmatpush1.bf16.msra.mxu0 0
    %193 = vmatprep.mubr.bf16.mxu0 0
    %194 = vmatmul.mubr.bf16.gmra.mrb[0].mxu0 %v102
    %v195 = vpop.f32.mrb[0].mxu0
    %v196 = vadd.f32 0.0, %v195
    %v197 = vpop.f32.mrb[0].mxu0
    %v198 = vadd.f32 0.0, %v197
    %v199 = vpop.f32.mrb[0].mxu0
    %v200 = vpop.f32.mrb[0].mxu0
    %201 = vdwg.mxu0
    %v202 = vmax.f32 %v155, 0.0
    %v203 = vmax.f32 %v157, 0.0
    %v204 = vmax.f32 %v196, 0.0
    %v205 = vmax.f32 %v198, 0.0
    %206 = vst [vmem:[#allocation7] sm:$0xff] %v202
    %207 = vst [vmem:[#allocation7 + $0x8] sm:$0xff] %v203
    %208 = vst [vmem:[#allocation7 + $0x10] sm:$0xff] %v204
    %209 = vst [vmem:[#allocation7 + $0x18] sm:$0xff] %v205
    // Predicated region
    $region18: #{tpu_custom_call.1} parent=1 // pred_check
      _
    $region19: #{tpu_custom_call.1} parent=1 // pred_check_branch
      %211 = sbr.rel (0) target = $region21
    $region20: #{tpu_custom_call.1} parent=1 // pred_region
      %s213 = ssub.s32 512, 512
      %214 = vsyncadd [#allocation4], %s213
      %s216 = sshll.u32 [#allocation7], 4
      %s217 = int_to_ptr.vmem [resolvable:$true] %s216
      %219 = dma.vmem_to_hbm [thread:$0]  %s217, 512, %s2, [#allocation4]
    $region21: #{tpu_custom_call.1} parent=1 // pred_fallthru
      _
    // Predicated region
    $region22: #{tpu_custom_call.1} parent=1 // pred_check
      _
    $region23: #{tpu_custom_call.1} parent=1 // pred_check_branch
      %221 = sbr.rel (0) target = $region25
    $region24: #{tpu_custom_call.1} parent=1 // pred_region
      %222 = dma.done [#allocation4], 512
    $region25: #{tpu_custom_call.1} parent=1 // pred_fallthru
      _
    %223 = vsyncpa [#allocation3], 1
    %224 = vsyncpa [#allocation6], 1
    %225 = vsyncpa [#allocation4], 1

</llo_original>
